<compile_context>
chip_gen: v6e
topology: v6e:2x2x1
jax: 0.10.0
libtpu: 0.0.40
codegen_flags: <defaults>
</compile_context>

<pallas_src>
import functools

import jax
import jax.numpy as jnp
from jax.experimental import pallas as pl
from jax.experimental.pallas import tpu as pltpu


def _round_up(x: int, m: int) -> int:
    return ((x + m - 1) // m) * m


def _largest_aligned_divisor(dim: int, align: int, cap: int) -> int:
    """Largest multiple of `align` that divides `dim` and is <= max(cap, align)."""
    assert dim % align == 0
    units = dim // align
    max_units = max(1, cap // align)
    best = 1
    for d in range(1, min(units, max_units) + 1):
        if units % d == 0:
            best = d
    return best * align


def _select_tiles(m_aligned: int, n_aligned: int, k_aligned: int,
                  operand_itemsize: int):
    """Pick lane/sublane-aligned tiles that exactly divide the padded dims.

    Caps keep the double-buffered footprint (x, W, bias, out tiles) around
    ~7 MiB, under every generation's default scoped VMEM (16 MiB on v5e,
    32 MiB on v6e/v7x), so no vmem_limit_bytes override is needed.
    """
    tn_cap = 1024 if operand_itemsize <= 2 else 512   # bf16 halves W/x traffic
    tm = _largest_aligned_divisor(m_aligned, 8, 256)
    tn = _largest_aligned_divisor(n_aligned, 128, tn_cap)
    tk = _largest_aligned_divisor(k_aligned, 128, 1024)
    # v7x has 2 TensorCores: if both parallel axes collapse to a single grid
    # point, split N so each core gets at least one output tile.
    if m_aligned // tm == 1 and n_aligned // tn == 1 and n_aligned >= 256:
        tn = _largest_aligned_divisor(n_aligned, 128, n_aligned // 2)
    assert tm % 8 == 0 and m_aligned % tm == 0
    assert tn % 128 == 0 and n_aligned % tn == 0
    assert tk % 128 == 0 and k_aligned % tk == 0
    return tm, tn, tk


def _pad_to(a, shape):
    pads = [(0, s - d) for d, s in zip(a.shape, shape)]
    if all(p == (0, 0) for p in pads):
        return a
    return jnp.pad(a, pads)


def naive_linear_kernel(x_ref, w_ref, b_ref, o_ref):
    """One (tm, tn) output tile; K is the innermost ("arbitrary") grid axis.

    The output BlockSpec index_map ignores k, so o_ref (f32) is resident in
    VMEM across the whole K reduction — accumulate directly into it (no
    separate scratch).  Bias is written exactly once, at k == 0.
    """
    k = pl.program_id(2)

    @pl.when(k == 0)
    def _init():
        o_ref[...] = jnp.broadcast_to(
            b_ref[...].astype(o_ref.dtype), o_ref.shape)

    o_ref[...] += jnp.dot(
        x_ref[...], w_ref[...], preferred_element_type=jnp.float32
    ).astype(o_ref.dtype)


@functools.partial(
    jax.jit, static_argnames=("out_features", "compute_dtype", "tm", "tn", "tk"))
def _forward(x, w_padded, bias2d, *, out_features, compute_dtype, tm, tn, tk):
    """x: (B, K) unpadded; w_padded: (K_pad, N_pad) already padded/cast;
    bias2d: (1, N_pad) f32.  Returns (B, out_features) f32."""
    B, K = x.shape
    K_pad, N_pad = w_padded.shape
    m_aligned = _round_up(B, 8)
    assert m_aligned % tm == 0 and N_pad % tn == 0 and K_pad % tk == 0

    # Only x's K padding must be zeros (zero columns contribute nothing);
    # jnp.pad zero-fills the M padding too, which is simply sliced off below.
    x_p = _pad_to(x, (m_aligned, K_pad)).astype(compute_dtype)

    grid = (m_aligned // tm, N_pad // tn, K_pad // tk)
    flops = 2 * m_aligned * N_pad * K_pad
    bytes_accessed = (
        x_p.size * x_p.dtype.itemsize
        + w_padded.size * w_padded.dtype.itemsize
        + bias2d.size * bias2d.dtype.itemsize
        + m_aligned * N_pad * 4)

    out_padded = pl.pallas_call(
        naive_linear_kernel,
        out_shape=jax.ShapeDtypeStruct((m_aligned, N_pad), jnp.float32),
        grid_spec=pltpu.PrefetchScalarGridSpec(
            num_scalar_prefetch=0,
            grid=grid,
            in_specs=[
                pl.BlockSpec((tm, tk), lambda i, j, k: (i, k)),   # x tile
                pl.BlockSpec((tk, tn), lambda i, j, k: (k, j)),   # W tile
                pl.BlockSpec((1, tn), lambda i, j, k: (0, j)),    # bias tile
            ],
            out_specs=pl.BlockSpec((tm, tn), lambda i, j, k: (i, j)),
        ),
        compiler_params=pltpu.CompilerParams(
            dimension_semantics=("parallel", "parallel", "arbitrary"),
        ),
        cost_estimate=pl.CostEstimate(
            flops=flops, transcendentals=0, bytes_accessed=bytes_accessed),
    )(x_p, w_padded, bias2d)

    return out_padded[:B, :out_features]


class NaiveLinearPallas:
    """Pallas TPU port of NaiveLinear: y = x @ W + b.

    W ~ U(-1, 1) of shape (in_features, out_features), b = zeros — exactly as
    in the PyTorch module.  Weight/bias padding (and the optional bf16 cast)
    is done ONCE here, so the per-call path touches the weight only via the
    kernel's DMAs (no per-call jnp.pad copy of W in HBM).
    """

    def __init__(self, in_features, out_features, *, key,
                 compute_dtype=jnp.float32):
        self.in_features = int(in_features)
        self.out_features = int(out_features)
        self.compute_dtype = jnp.dtype(compute_dtype)

        # Matches torch.nn.init.uniform_(weight, -1, 1); zeros_(bias).
        self.weight = jax.random.uniform(
            key, (in_features, out_features), dtype=jnp.float32,
            minval=-1.0, maxval=1.0)
        self.bias = jnp.zeros((out_features,), dtype=jnp.float32)

        self._k_aligned = _round_up(in_features, 128)
        self._n_aligned = _round_up(out_features, 128)
        # W padding values along K do not need to be zero (x's K padding is
        # zero) and N padding is sliced off; jnp.pad zero-fill is just tidy.
        self._w_padded = _pad_to(
            self.weight, (self._k_aligned, self._n_aligned)
        ).astype(self.compute_dtype)
        # Bias stays f32: it is added into the resident f32 output tile.
        self._bias2d = _pad_to(self.bias, (self._n_aligned,)).reshape(
            1, self._n_aligned).astype(jnp.float32)

    def __call__(self, x):
        B, K = x.shape
        assert K == self.in_features
        tm, tn, tk = _select_tiles(
            _round_up(B, 8), self._n_aligned, self._k_aligned,
            self.compute_dtype.itemsize)
        return _forward(x, self._w_padded, self._bias2d,
                        out_features=self.out_features,
                        compute_dtype=self.compute_dtype,
                        tm=tm, tn=tn, tk=tk)


def naive_linear(x, weight, bias, *, compute_dtype=jnp.float32,
                 tm=None, tn=None, tk=None):
    """One-shot functional form: y = x @ weight + bias.

    Pads the weight per call — prefer NaiveLinearPallas for repeated calls so
    the weight padding/cast is hoisted out of the forward path.
    """
    B, K = x.shape
    K_w, N = weight.shape
    assert K == K_w, "weight in_features must match x"
    compute_dtype = jnp.dtype(compute_dtype)

    m_a = _round_up(B, 8)
    n_a = _round_up(N, 128)
    k_a = _round_up(K, 128)
    auto_tm, auto_tn, auto_tk = _select_tiles(m_a, n_a, k_a,
                                              compute_dtype.itemsize)
    tm = auto_tm if tm is None else tm
    tn = auto_tn if tn is None else tn
    tk = auto_tk if tk is None else tk
    # Explicit (8,128) alignment + divisibility checks for user-supplied tiles
    # (clear error instead of a Mosaic lowering failure).
    assert tm % 8 == 0 and m_a % tm == 0, f"tm={tm} must be a multiple of 8 dividing {m_a}"
    assert tn % 128 == 0 and n_a % tn == 0, f"tn={tn} must be a multiple of 128 dividing {n_a}"
    assert tk % 128 == 0 and k_a % tk == 0, f"tk={tk} must be a multiple of 128 dividing {k_a}"

    w_p = _pad_to(weight, (k_a, n_a)).astype(compute_dtype)
    b2d = _pad_to(bias, (n_a,)).reshape(1, n_a).astype(jnp.float32)
    return _forward(x, w_p, b2d, out_features=N, compute_dtype=compute_dtype,
                    tm=tm, tn=tn, tk=tk)


if __name__ == "__main__":
    key = jax.random.PRNGKey(0)
    k_layer, k_x, k_x2, k_w2, k_b2, k_x3 = jax.random.split(key, 6)

    # ---- 1) Small module-equivalent check (NaiveLinear init semantics) ----
    batch, in_features, out_features = 8, 32, 32
    layer = NaiveLinearPallas(in_features, out_features, key=k_layer)
    x = jax.random.normal(k_x, (batch, in_features), dtype=jnp.float32)
    out = layer(x)
    jax.block_until_ready(out)
    ref = jnp.matmul(x, layer.weight) + layer.bias
    assert out.shape == (batch, out_features)
    assert jnp.allclose(out, ref, atol=1e-5, rtol=1e-5)

    # ---- 2) Tile-exercising f32 check: odd dims, multiple K grid steps ----
    B2, K2, N2 = 200, 1536, 320
    x2 = jax.random.normal(k_x2, (B2, K2), dtype=jnp.float32)
    w2 = jax.random.uniform(k_w2, (K2, N2), dtype=jnp.float32,
                            minval=-1.0, maxval=1.0)
    b2 = jax.random.normal(k_b2, (N2,), dtype=jnp.float32)
    out2 = naive_linear(x2, w2, b2)
    jax.block_until_ready(out2)
    ref2 = jnp.matmul(x2, w2) + b2
    assert out2.shape == (B2, N2)
    assert jnp.allclose(out2, ref2, atol=1e-3, rtol=1e-3)

    # ---- 3) bf16-operand path (f32 accumulation), looser tolerance ----
    layer_bf16 = NaiveLinearPallas(1024, 512, key=k_layer,
                                   compute_dtype=jnp.bfloat16)
    x3 = jax.random.normal(k_x3, (128, 1024), dtype=jnp.float32)
    out3 = layer_bf16(x3)
    jax.block_until_ready(out3)
    ref3 = jnp.matmul(x3, layer_bf16.weight) + layer_bf16.bias
    assert out3.dtype == jnp.float32
    assert jnp.allclose(out3, ref3, atol=0.5, rtol=5e-2)

    print("KERNEL_OK")
</pallas_src>

<mosaic_0001>
module attributes {stable_mosaic.version = 11 : i64} {
  func.func @naive_linear_kernel(%arg0: i32, %arg1: i32, %arg2: i32, %arg3: memref<8x128xf32, #tpu.memory_space<vmem>>, %arg4: memref<128x128xf32, #tpu.memory_space<vmem>>, %arg5: memref<1x128xf32, #tpu.memory_space<vmem>>, %arg6: memref<8x128xf32, #tpu.memory_space<vmem>>) attributes {dimension_semantics = [#tpu.dimension_semantics<parallel>, #tpu.dimension_semantics<parallel>, #tpu.dimension_semantics<arbitrary>], iteration_bounds = array<i64: 1, 1, 1>, scalar_prefetch = 0 : i64, scratch_operands = 0 : i64, tpu.core_type = #tpu.core_type<tc>, window_params = [{transform_indices = @transform_0, window_bounds = array<i64: 8, 128>}, {transform_indices = @transform_1, window_bounds = array<i64: 128, 128>}, {transform_indices = @transform_2, window_bounds = array<i64: 1, 128>}, {transform_indices = @transform_3, window_bounds = array<i64: 8, 128>}]} {
    %c0_i32 = arith.constant 0 : i32
    %0 = arith.cmpi eq, %arg2, %c0_i32 : i32
    %1 = arith.extui %0 : i1 to i32
    %c0_i32_0 = arith.constant 0 : i32
    %2 = arith.cmpi ne, %1, %c0_i32_0 : i32
    scf.if %2 {
      %c0_8 = arith.constant 0 : index
      %c0_9 = arith.constant 0 : index
      %9 = vector.load %arg5[%c0_8, %c0_9] : memref<1x128xf32, #tpu.memory_space<vmem>>, vector<1x128xf32>
      %10 = vector.shape_cast %9 : vector<1x128xf32> to vector<1x128xf32>
      %11 = vector.broadcast %10 : vector<1x128xf32> to vector<8x128xf32>
      %c0_10 = arith.constant 0 : index
      %c0_11 = arith.constant 0 : index
      %12 = vector.load %arg6[%c0_10, %c0_11] : memref<8x128xf32, #tpu.memory_space<vmem>>, vector<8x128xf32>
      tpu.vector_store %arg6[%c0_10, %c0_11], %11 {strides = array<i32>} : memref<8x128xf32, #tpu.memory_space<vmem>>, vector<8x128xf32>,
    } else {
    }
    %c0 = arith.constant 0 : index
    %c0_1 = arith.constant 0 : index
    %3 = vector.load %arg6[%c0, %c0_1] : memref<8x128xf32, #tpu.memory_space<vmem>>, vector<8x128xf32>
    %c0_2 = arith.constant 0 : index
    %c0_3 = arith.constant 0 : index
    %4 = vector.load %arg3[%c0_2, %c0_3] : memref<8x128xf32, #tpu.memory_space<vmem>>, vector<8x128xf32>
    %c0_4 = arith.constant 0 : index
    %c0_5 = arith.constant 0 : index
    %5 = vector.load %arg4[%c0_4, %c0_5] : memref<128x128xf32, #tpu.memory_space<vmem>>, vector<128x128xf32>
    %cst = arith.constant dense<0.000000e+00> : vector<8x128xf32>
    %6 = tpu.matmul %4, %5, %cst {dimension_numbers = #tpu.dot_dimension_numbers<[1], [0], [0], [1], [0, 0, 1, 1], [], []>} : vector<8x128xf32>, vector<128x128xf32>, vector<8x128xf32> -> vector<8x128xf32>
    %7 = arith.addf %3, %6 : vector<8x128xf32>
    %c0_6 = arith.constant 0 : index
    %c0_7 = arith.constant 0 : index
    %8 = vector.load %arg6[%c0_6, %c0_7] : memref<8x128xf32, #tpu.memory_space<vmem>>, vector<8x128xf32>
    tpu.vector_store %arg6[%c0_6, %c0_7], %7 {strides = array<i32>} : memref<8x128xf32, #tpu.memory_space<vmem>>, vector<8x128xf32>,
    return
  }
  func.func @transform_0(%arg0: i32, %arg1: i32, %arg2: i32) -> (i32, i32) {
    %c0_i32 = arith.constant 0 : i32
    return %arg0, %arg2 : i32, i32
  }
  func.func @transform_1(%arg0: i32, %arg1: i32, %arg2: i32) -> (i32, i32) {
    %c0_i32 = arith.constant 0 : i32
    return %arg2, %arg1 : i32, i32
  }
  func.func @transform_2(%arg0: i32, %arg1: i32, %arg2: i32) -> (i32, i32) {
    %c0_i32 = arith.constant 0 : i32
    %c0_i32_0 = arith.constant 0 : i32
    return %c0_i32, %arg1 : i32, i32
  }
  func.func @transform_3(%arg0: i32, %arg1: i32, %arg2: i32) -> (i32, i32) {
    %c0_i32 = arith.constant 0 : i32
    return %arg0, %arg1 : i32, i32
  }
}

</mosaic_0001>

<llo_original>
// kernel: _forward.1
$region0: #{_forward.1}
  #allocation0 [shape = 'u32[]', space=smem, size = 0x4, offset = 0x4, fixed_abs, tag = 'smem constant byte address 0x4 - core index']
  #allocation1 [shape = 'u32[144,128]{1,0:T(1,128)}', space=vmem, size = 0x12000, scoped, tag = 'internal scratch']
  %s0 = inlined_call_operand.vmem [shape: f32[8,128], index: 0, kind: input, shape index: {}]
  %s1 = inlined_call_operand.hbm [shape: f32[128,128], index: 1, kind: input, shape index: {}]
  %s2 = inlined_call_operand.vmem [shape: f32[1,128], index: 2, kind: input, shape index: {}]
  %s3 = inlined_call_operand.hbm [shape: f32[8,128], index: 3, kind: output, shape index: {}]
  %s4 = sld [smem:[#allocation0]]
  $region30: #{_forward.1} parent=0
    _
  %s6 = ssub.s32 1, %s4
  %s7 = scalar_select 0, %s6, %s4
  $region1: #{_forward.1} parent=0
    #allocation2 [shape = 'u8[65536]{0}', space=vmem, size = 0x10000, scoped, tag = 'input window, operand 1, single buffered']
    #allocation3 [shape = 's32[1]{0}', space=sflag, size = 0x4, scoped, tag = 'scoped memory for _forward.1']
    #allocation4 [shape = 's32[1]{0}', space=sflag, size = 0x4, scoped, tag = 'scoped memory for _forward.1']
    #allocation5 [shape = 'u8[4096]{0}', space=vmem, size = 0x1000, scoped, tag = 'output window, operand 0, single buffered']
    %8 = vsyncpa [#allocation3], 0
    %9 = vsyncpa [#allocation4], 0
    // Predicated region
    $region2: #{_forward.1} parent=1 // pred_check
      _
    $region3: #{_forward.1} parent=1 // pred_check_branch
      %11 = sbr.rel (0) target = $region5
    $region4: #{_forward.1} parent=1 // pred_region
      _
    $region5: #{_forward.1} parent=1 // pred_fallthru
      _
    // Predicated region
    $region6: #{_forward.1} parent=1 // pred_check
      _
    $region7: #{_forward.1} parent=1 // pred_check_branch
      %13 = sbr.rel (0) target = $region9
    $region8: #{_forward.1} parent=1 // pred_region
      %s15 = ssub.s32 2048, 2048
      %16 = vsyncadd [#allocation3], %s15
      %s17 = sshll.u32 [#allocation2], 4
      %s18 = int_to_ptr.vmem [resolvable:$true] %s17
      %23 = dma.hbm_to_vmem [thread:$0]  %s1, 2048, %s18, [#allocation3], 128, 128, 8
    $region9: #{_forward.1} parent=1 // pred_fallthru
      _
    // Predicated region
    $region10: #{_forward.1} parent=1 // pred_check
      _
    $region11: #{_forward.1} parent=1 // pred_check_branch
      %25 = sbr.rel (0) target = $region13
    $region12: #{_forward.1} parent=1 // pred_region
      _
    $region13: #{_forward.1} parent=1 // pred_fallthru
      _
    // Predicated region
    $region14: #{_forward.1} parent=1 // pred_check
      _
    $region15: #{_forward.1} parent=1 // pred_check_branch
      %27 = sbr.rel (0) target = $region17
    $region16: #{_forward.1} parent=1 // pred_region
      %28 = dma.done [#allocation3], 2048
    $region17: #{_forward.1} parent=1 // pred_fallthru
      _
    %p29 = scmp.eq.s32.totalorder 0, 0
    // Predicated region
    $region18: #{_forward.1} parent=1 // pred_check
      %p30 = pneg %p29
    $region19: #{_forward.1} parent=1 // pred_check_branch
      %32 = sbr.rel (%p30) target = $region21
    $region20: #{_forward.1} parent=1 // pred_region
      %v33 = vld [vmem:[%s2] sm:$0x1]
      %v35 = vlaneseq
      %v36 = vshrl.u32 %v35, 7
      %v37 = vsub.s32 0, %v36
      %v38 = vrot.slane %v33, %v37
      %40 = vst [vmem:[#allocation5] sm:$0xff] %v38
    $region21: #{_forward.1} parent=1 // pred_fallthru
      _
    %v41 = vld [vmem:[#allocation5] sm:$0xff]
    %v42 = vld [vmem:[%s0] sm:$0xff]
    %v43 = vld [vmem:[#allocation2] sm:$0xff]
    %v44 = vld [vmem:[#allocation2 + $0x8] sm:$0xff]
    %v45 = vld [vmem:[#allocation2 + $0x10] sm:$0xff]
    %v46 = vld [vmem:[#allocation2 + $0x18] sm:$0xff]
    %v47 = vld [vmem:[#allocation2 + $0x20] sm:$0xff]
    %v48 = vld [vmem:[#allocation2 + $0x28] sm:$0xff]
    %v49 = vld [vmem:[#allocation2 + $0x30] sm:$0xff]
    %v50 = vld [vmem:[#allocation2 + $0x38] sm:$0xff]
    %v51 = vld [vmem:[#allocation2 + $0x40] sm:$0xff]
    %v52 = vld [vmem:[#allocation2 + $0x48] sm:$0xff]
    %v53 = vld [vmem:[#allocation2 + $0x50] sm:$0xff]
    %v54 = vld [vmem:[#allocation2 + $0x58] sm:$0xff]
    %v55 = vld [vmem:[#allocation2 + $0x60] sm:$0xff]
    %v56 = vld [vmem:[#allocation2 + $0x68] sm:$0xff]
    %v57 = vld [vmem:[#allocation2 + $0x70] sm:$0xff]
    %v58 = vld [vmem:[#allocation2 + $0x78] sm:$0xff]
    %59 = vmatprep.subr.mxu0 0.0
    %60 = vmatpush1.msra.mxu0 %v58
    %61 = vmatprep.subr.mxu0 0.0
    %62 = vmatpush1.msra.mxu0 %v57
    %63 = vmatprep.subr.mxu0 0.0
    %64 = vmatpush1.msra.mxu0 %v56
    %65 = vmatprep.subr.mxu0 0.0
    %66 = vmatpush1.msra.mxu0 %v55
    %67 = vmatprep.subr.mxu0 0.0
    %68 = vmatpush1.msra.mxu0 %v54
    %69 = vmatprep.subr.mxu0 0.0
    %70 = vmatpush1.msra.mxu0 %v53
    %71 = vmatprep.subr.mxu0 0.0
    %72 = vmatpush1.msra.mxu0 %v52
    %73 = vmatprep.subr.mxu0 0.0
    %74 = vmatpush1.msra.mxu0 %v51
    %75 = vmatprep.subr.mxu0 0.0
    %76 = vmatpush1.msra.mxu0 %v50
    %77 = vmatprep.subr.mxu0 0.0
    %78 = vmatpush1.msra.mxu0 %v49
    %79 = vmatprep.subr.mxu0 0.0
    %80 = vmatpush1.msra.mxu0 %v48
    %81 = vmatprep.subr.mxu0 0.0
    %82 = vmatpush1.msra.mxu0 %v47
    %83 = vmatprep.subr.mxu0 0.0
    %84 = vmatpush1.msra.mxu0 %v46
    %85 = vmatprep.subr.mxu0 0.0
    %86 = vmatpush1.msra.mxu0 %v45
    %87 = vmatprep.subr.mxu0 0.0
    %88 = vmatpush1.msra.mxu0 %v44
    %89 = vmatprep.subr.mxu0 0.0
    %90 = vmatpush1.msra.mxu0 %v43
    %91 = vmatprep.subr.mxu0 0.0
    %92 = vmatpush2.msra.mxu0 0.0
    %93 = vmatprep.subr.mxu0 0.0
    %94 = vmatpush2.msra.mxu0 0.0
    %95 = vmatprep.subr.mxu0 0.0
    %96 = vmatpush2.msra.mxu0 0.0
    %97 = vmatprep.subr.mxu0 0.0
    %98 = vmatpush2.msra.mxu0 0.0
    %99 = vmatprep.subr.mxu0 0.0
    %100 = vmatpush2.msra.mxu0 0.0
    %101 = vmatprep.subr.mxu0 0.0
    %102 = vmatpush2.msra.mxu0 0.0
    %103 = vmatprep.subr.mxu0 0.0
    %104 = vmatpush2.msra.mxu0 0.0
    %105 = vmatprep.subr.mxu0 0.0
    %106 = vmatpush2.msra.mxu0 0.0
    %107 = vmatprep.subr.mxu0 0.0
    %108 = vmatpush2.msra.mxu0 0.0
    %109 = vmatprep.subr.mxu0 0.0
    %110 = vmatpush2.msra.mxu0 0.0
    %111 = vmatprep.subr.mxu0 0.0
    %112 = vmatpush2.msra.mxu0 0.0
    %113 = vmatprep.subr.mxu0 0.0
    %114 = vmatpush2.msra.mxu0 0.0
    %115 = vmatprep.subr.mxu0 0.0
    %116 = vmatpush2.msra.mxu0 0.0
    %117 = vmatprep.subr.mxu0 0.0
    %118 = vmatpush2.msra.mxu0 0.0
    %119 = vmatprep.subr.mxu0 0.0
    %120 = vmatpush2.msra.mxu0 0.0
    %121 = vmatprep.subr.mxu0 0.0
    %122 = vmatpush2.msra.mxu0 0.0
    %123 = vmatprep.mubr.f32.mxu0 0.0
    %124 = vmatmul.mubr.f32.gmra.mxu0 %v42
    %v125 = vpop.f32.mrf.mxu0
    %v126 = vadd.f32 0.0, %v125
    %v127 = vpop.f32.mrf.mxu0
    %128 = vdwg.mxu0
    %v129 = vadd.f32 %v41, %v126
    %130 = vst [vmem:[#allocation5] sm:$0xff] %v129
    // Predicated region
    $region22: #{_forward.1} parent=1 // pred_check
      _
    $region23: #{_forward.1} parent=1 // pred_check_branch
      %132 = sbr.rel (0) target = $region25
    $region24: #{_forward.1} parent=1 // pred_region
      %s134 = ssub.s32 128, 128
      %135 = vsyncadd [#allocation4], %s134
      %s137 = sshll.u32 [#allocation5], 4
      %s138 = int_to_ptr.vmem [resolvable:$true] %s137
      %140 = dma.vmem_to_hbm [thread:$0]  %s138, 128, %s3, [#allocation4]
    $region25: #{_forward.1} parent=1 // pred_fallthru
      _
    // Predicated region
    $region26: #{_forward.1} parent=1 // pred_check
      _
    $region27: #{_forward.1} parent=1 // pred_check_branch
      %142 = sbr.rel (0) target = $region29
    $region28: #{_forward.1} parent=1 // pred_region
      %143 = dma.done [#allocation4], 128
    $region29: #{_forward.1} parent=1 // pred_fallthru
      _
    %144 = vsyncpa [#allocation3], 1
    %145 = vsyncpa [#allocation4], 1

</llo_original>
